<compile_context>
chip_gen: v6e
topology: v6e:2x2x1
jax: 0.10.0
libtpu: 0.0.40
codegen_flags: <defaults>
</compile_context>

<pallas_src>
import functools

import jax
import jax.numpy as jnp
from jax.experimental import pallas as pl
from jax.experimental.pallas import tpu as pltpu

_LANE = 128
_SCALE_OUT = 1.7159
_SCALE_IN = 0.666


def _lecun_kernel(x_ref, o_ref, *, compute_dtype):
    # 2 VPU muls + 1 EUP tanh per element; cast back to I/O dtype on store.
    x = x_ref[...].astype(compute_dtype)
    o_ref[...] = (_SCALE_OUT * jnp.tanh(_SCALE_IN * x)).astype(o_ref.dtype)


def _chip_info():
    """(is_v7, pre_v6).  Defaults to the safe path if detection fails."""
    try:
        kind = jax.devices()[0].device_kind.lower()
    except Exception:
        kind = ""
    is_v7 = "v7" in kind
    # bf16 EUP/VPU exist only from v6 onward; unknown chips upcast (always correct).
    pre_v6 = (kind == "") or any(t in kind for t in ("v2", "v3", "v4", "v5"))
    return is_v7, pre_v6


def _lecun_slab(slab, dtype, *, block_bytes, is_v7, compute_dtype):
    rows, lane = slab.shape
    itemsize = jnp.dtype(dtype).itemsize
    sub = max(8, 32 // max(itemsize, 1))  # sublane multiple (f32:8, bf16:16, i8:32)
    row_bytes = lane * itemsize

    # --- tile selection ------------------------------------------------------
    # Largest sublane-multiple block under the byte budget; a single
    # full-extent block is used when the whole slab fits (exempt from the
    # (8,128) divisibility rule).  Ragged last blocks are masked by Pallas.
    max_block_rows = max(sub, ((block_bytes // row_bytes) // sub) * sub)
    if rows <= max_block_rows:
        block_rows = rows
    else:
        block_rows = max_block_rows

    # Only dual-TensorCore v7x benefits from a minimum grid-step count; on
    # single-TC v5e/v6e extra steps just add ~0.35 us each for nothing.
    min_steps = 4 if is_v7 else 1
    if min_steps > 1 and rows > min_steps * sub:
        if pl.cdiv(rows, block_rows) < min_steps:
            block_rows = max(sub, ((rows // min_steps) // sub) * sub)

    grid = (pl.cdiv(rows, block_rows),)

    # Cover in+out double-buffering (4x block) plus headroom; capped well under
    # v7x's 64 MiB physical VMEM, above v5e's 16 MiB scoped default.
    block_bytes_actual = block_rows * row_bytes
    vmem_limit = int(min(64 << 20, max(16 << 20, 6 * block_bytes_actual)))

    n = rows * lane
    cost = pl.CostEstimate(
        flops=2 * n,
        transcendentals=n,
        bytes_accessed=2 * n * itemsize,
    )

    return pl.pallas_call(
        functools.partial(_lecun_kernel, compute_dtype=compute_dtype),
        out_shape=jax.ShapeDtypeStruct((rows, lane), dtype),
        grid_spec=pltpu.PrefetchScalarGridSpec(
            num_scalar_prefetch=0,
            grid=grid,
            in_specs=[pl.BlockSpec((block_rows, lane), lambda i: (i, 0))],
            out_specs=pl.BlockSpec((block_rows, lane), lambda i: (i, 0)),
        ),
        compiler_params=pltpu.CompilerParams(
            dimension_semantics=("parallel",),
            vmem_limit_bytes=vmem_limit,
        ),
        cost_estimate=cost,
    )(slab)


def lecun(x: jax.Array, *, block_bytes: int = 4 << 20) -> jax.Array:
    """Applies 1.7159 * tanh(0.666 * x) elementwise via a Pallas TPU kernel."""
    orig_shape = x.shape
    dtype = x.dtype
    n = x.size
    if n == 0:
        return x

    is_v7, pre_v6 = _chip_info()
    compute_dtype = dtype if (dtype == jnp.bfloat16 and not pre_v6) else jnp.float32

    if n % _LANE == 0:
        # Common case (e.g. NCHW with 128-divisible numel): pure reshape in/out,
        # zero extra HBM passes.
        slab = x.reshape(n // _LANE, _LANE)
        out = _lecun_slab(slab, dtype, block_bytes=block_bytes, is_v7=is_v7,
                          compute_dtype=compute_dtype)
        return out.reshape(orig_shape)

    # Unaligned total size: run the 128-aligned bulk through the kernel and
    # compute the (<128 element) tail with plain jnp -- avoids the old full-array
    # pad + trim round trips around a bandwidth-bound kernel.
    flat = x.reshape(-1)
    bulk = (n // _LANE) * _LANE
    tail = flat[bulk:]
    tail_y = (_SCALE_OUT * jnp.tanh(_SCALE_IN * tail.astype(compute_dtype))).astype(dtype)
    if bulk == 0:
        return tail_y.reshape(orig_shape)
    bulk_y = _lecun_slab(flat[:bulk].reshape(bulk // _LANE, _LANE), dtype,
                         block_bytes=block_bytes, is_v7=is_v7,
                         compute_dtype=compute_dtype)
    return jnp.concatenate([bulk_y.reshape(-1), tail_y]).reshape(orig_shape)


if __name__ == "__main__":
    key = jax.random.PRNGKey(0)
    # NCHW input, small shapes: batch=2, channels=4, spatial=16x16
    x = jax.random.normal(key, (2, 4, 16, 16), dtype=jnp.float32)

    y = lecun(x)
    jax.block_until_ready(y)

    # Reference check in plain JAX (same constants as the PyTorch module).
    y_ref = 1.7159 * jnp.tanh(0.666 * x)
    assert y.shape == x.shape
    assert y.dtype == x.dtype
    assert jnp.allclose(y, y_ref, atol=1e-5, rtol=1e-5)

    # Secondary check: non-128-divisible numel exercises the bulk + tail path.
    x2 = jax.random.normal(jax.random.PRNGKey(1), (2, 3, 11, 13), dtype=jnp.float32)
    y2 = lecun(x2)
    jax.block_until_ready(y2)
    assert jnp.allclose(y2, 1.7159 * jnp.tanh(0.666 * x2), atol=1e-5, rtol=1e-5)

    print("KERNEL_OK")
</pallas_src>

<mosaic_0001>
module attributes {stable_mosaic.version = 11 : i64} {
  func.func @_lecun_kernel(%arg0: i32, %arg1: memref<16x128xf32, #tpu.memory_space<vmem>>, %arg2: memref<16x128xf32, #tpu.memory_space<vmem>>) attributes {dimension_semantics = [#tpu.dimension_semantics<parallel>], iteration_bounds = array<i64: 1>, scalar_prefetch = 0 : i64, scratch_operands = 0 : i64, tpu.core_type = #tpu.core_type<tc>, window_params = [{transform_indices = @transform_0, window_bounds = array<i64: 16, 128>}, {transform_indices = @transform_1, window_bounds = array<i64: 16, 128>}]} {
    %c0 = arith.constant 0 : index
    %c0_0 = arith.constant 0 : index
    %0 = vector.load %arg1[%c0, %c0_0] : memref<16x128xf32, #tpu.memory_space<vmem>>, vector<16x128xf32>
    %cst = arith.constant 6.660000e-01 : f32
    %1 = vector.broadcast %cst : f32 to vector<16x128xf32>
    %2 = arith.mulf %1, %0 : vector<16x128xf32>
    %3 = math.tanh %2 : vector<16x128xf32>
    %cst_1 = arith.constant 1.715900e+00 : f32
    %4 = vector.broadcast %cst_1 : f32 to vector<16x128xf32>
    %5 = arith.mulf %4, %3 : vector<16x128xf32>
    %c0_2 = arith.constant 0 : index
    %c0_3 = arith.constant 0 : index
    %6 = vector.load %arg2[%c0_2, %c0_3] : memref<16x128xf32, #tpu.memory_space<vmem>>, vector<16x128xf32>
    tpu.vector_store %arg2[%c0_2, %c0_3], %5 {strides = array<i32>} : memref<16x128xf32, #tpu.memory_space<vmem>>, vector<16x128xf32>,
    return
  }
  func.func @transform_0(%arg0: i32) -> (i32, i32) {
    %c0_i32 = arith.constant 0 : i32
    %c0_i32_0 = arith.constant 0 : i32
    return %arg0, %c0_i32 : i32, i32
  }
  func.func @transform_1(%arg0: i32) -> (i32, i32) {
    %c0_i32 = arith.constant 0 : i32
    %c0_i32_0 = arith.constant 0 : i32
    return %arg0, %c0_i32 : i32, i32
  }
}

</mosaic_0001>

<llo_original>
// kernel: tpu_custom_call.1
$region0: #{tpu_custom_call.1}
  #allocation0 [shape = 'u32[]', space=smem, size = 0x4, offset = 0x4, fixed_abs, tag = 'smem constant byte address 0x4 - core index']
  #allocation1 [shape = 'u32[144,128]{1,0:T(1,128)}', space=vmem, size = 0x12000, scoped, tag = 'internal scratch']
  %s0 = inlined_call_operand.hbm [shape: f32[16,128], index: 0, kind: input, shape index: {}]
  %s1 = inlined_call_operand.hbm [shape: f32[16,128], index: 1, kind: output, shape index: {}]
  %s2 = sld [smem:[#allocation0]]
  $region18: #{tpu_custom_call.1} parent=0
    _
  %s4 = ssub.s32 1, %s2
  %s5 = scalar_select 0, %s4, %s2
  $region1: #{tpu_custom_call.1} parent=0
    #allocation2 [shape = 'u8[8192]{0}', space=vmem, size = 0x2000, scoped, tag = 'input window, operand 0, single buffered']
    #allocation3 [shape = 's32[1]{0}', space=sflag, size = 0x4, scoped, tag = 'scoped memory for tpu_custom_call.1']
    #allocation4 [shape = 's32[1]{0}', space=sflag, size = 0x4, scoped, tag = 'scoped memory for tpu_custom_call.1']
    #allocation5 [shape = 'u8[8192]{0}', space=vmem, size = 0x2000, scoped, tag = 'output window, operand 0, single buffered']
    %6 = vsyncpa [#allocation3], 0
    %7 = vsyncpa [#allocation4], 0
    // Predicated region
    $region2: #{tpu_custom_call.1} parent=1 // pred_check
      _
    $region3: #{tpu_custom_call.1} parent=1 // pred_check_branch
      %9 = sbr.rel (0) target = $region5
    $region4: #{tpu_custom_call.1} parent=1 // pred_region
      %s11 = ssub.s32 256, 256
      %12 = vsyncadd [#allocation3], %s11
      %s13 = sshll.u32 [#allocation2], 4
      %s14 = int_to_ptr.vmem [resolvable:$true] %s13
      %19 = dma.hbm_to_vmem [thread:$0]  %s0, 256, %s14, [#allocation3], 128, 128, 8
    $region5: #{tpu_custom_call.1} parent=1 // pred_fallthru
      _
    // Predicated region
    $region6: #{tpu_custom_call.1} parent=1 // pred_check
      _
    $region7: #{tpu_custom_call.1} parent=1 // pred_check_branch
      %21 = sbr.rel (0) target = $region9
    $region8: #{tpu_custom_call.1} parent=1 // pred_region
      %22 = dma.done [#allocation3], 256
    $region9: #{tpu_custom_call.1} parent=1 // pred_fallthru
      _
    %v23 = vld [vmem:[#allocation2] sm:$0xff]
    %v24 = vld [vmem:[#allocation2 + $0x8] sm:$0xff]
    %v25 = vmul.f32 %v23, 0.666
    %v26 = vmul.f32 %v24, 0.666
    %v27 = vtanh.pop %v25
    %v28 = vtanh.pop %v26
    %v29 = vmul.f32 %v27, 1.7159
    %v30 = vmul.f32 %v28, 1.7159
    %31 = vst [vmem:[#allocation5] sm:$0xff] %v29
    %32 = vst [vmem:[#allocation5 + $0x8] sm:$0xff] %v30
    // Predicated region
    $region10: #{tpu_custom_call.1} parent=1 // pred_check
      _
    $region11: #{tpu_custom_call.1} parent=1 // pred_check_branch
      %34 = sbr.rel (0) target = $region13
    $region12: #{tpu_custom_call.1} parent=1 // pred_region
      %s36 = ssub.s32 256, 256
      %37 = vsyncadd [#allocation4], %s36
      %s38 = sshll.u32 [#allocation5], 4
      %s39 = int_to_ptr.vmem [resolvable:$true] %s38
      %44 = dma.vmem_to_hbm [thread:$0]  %s39, 256, %s1, [#allocation4], 128, 128, 8
    $region13: #{tpu_custom_call.1} parent=1 // pred_fallthru
      _
    // Predicated region
    $region14: #{tpu_custom_call.1} parent=1 // pred_check
      _
    $region15: #{tpu_custom_call.1} parent=1 // pred_check_branch
      %46 = sbr.rel (0) target = $region17
    $region16: #{tpu_custom_call.1} parent=1 // pred_region
      %47 = dma.done [#allocation4], 256
    $region17: #{tpu_custom_call.1} parent=1 // pred_fallthru
      _
    %48 = vsyncpa [#allocation3], 1
    %49 = vsyncpa [#allocation4], 1

</llo_original>
